<compile_context>
chip_gen: v5e
topology: v5e:2x2
jax: 0.10.0
libtpu: 0.0.40
codegen_flags: <defaults>
</compile_context>

<pallas_src>
import math

import jax
import jax.numpy as jnp
from jax.experimental import pallas as pl
from jax.experimental.pallas import tpu as pltpu


_LANE = 128
_SUBLANE_F32 = 8
_MAX_BLOCK_BYTES = 8 * 1024 * 1024      # per-block; in+out double-buffered ~= 32 MiB live
_VMEM_LIMIT_BYTES = 48 * 1024 * 1024    # explicit scoped-VMEM limit (ok on v5e/v6e/v7x)


def _identity_copy_kernel(x_ref, o_ref):
    # Pure streaming copy of one lane-dense VMEM tile.
    o_ref[...] = x_ref[...]


def _sublane(itemsize):
    # Native sublane packing: f32 -> 8, bf16/f16 -> 16, int8/fp8 -> 32.
    return _SUBLANE_F32 * max(1, 4 // itemsize)


def _largest_divisor_leq(n, cap, step=1):
    """Largest d <= cap with d % step == 0 and n % d == 0, else None."""
    cap = min(cap, n)
    d = (cap // step) * step
    while d >= step:
        if n % d == 0:
            return d
        d -= step
    return None


def _choose_layout(total_elems, itemsize):
    """Pick a lane-dense 2-D view (rows, cols) of the flat data and block_rows.

    Returns (rows, cols, block_rows) or None when total is not a multiple of 128.
    Prefers the widest cols (multiple of 128) such that one sublane-aligned row
    stripe fits in the per-block byte budget.
    """
    if total_elems % _LANE != 0:
        return None
    sublane = _sublane(itemsize)
    units = total_elems // _LANE                      # number of 128-wide lane groups
    max_units_per_block = max(1, _MAX_BLOCK_BYTES // (_LANE * sublane * itemsize))

    cols_units = None
    # Pass 1: widest cols with sublane-aligned rows (fully unmasked tiles).
    # Pass 2: widest cols that simply factors.
    for require_aligned_rows in (True, False):
        u = min(units, max_units_per_block)
        while u >= 1:
            if units % u == 0:
                rows = total_elems // (u * _LANE)
                if (not require_aligned_rows) or rows % sublane == 0 or rows < sublane:
                    cols_units = u
                    break
            u -= 1
        if cols_units is not None:
            break

    cols = cols_units * _LANE
    rows = total_elems // cols

    if rows % sublane != 0:
        # Small / oddly factored: one full-extent block along rows if it fits.
        if rows * cols * itemsize <= _MAX_BLOCK_BYTES:
            return rows, cols, rows
        br = _largest_divisor_leq(rows, max(1, _MAX_BLOCK_BYTES // (cols * itemsize)))
        return rows, cols, br or 1

    budget_rows = max(
        sublane, (_MAX_BLOCK_BYTES // (cols * itemsize)) // sublane * sublane
    )
    block_rows = _largest_divisor_leq(rows, budget_rows, step=sublane) or sublane
    return rows, cols, block_rows


def identity_flatten_free(x):
    """The actually-optimal torch.flatten(x, 1): metadata-only reshape, zero HBM traffic."""
    return x.reshape(x.shape[0], -1)


@jax.jit
def identity_flatten(x):
    """torch.flatten(x, 1) implemented with an explicit Pallas streaming-copy kernel."""
    n = x.shape[0]
    d = math.prod(x.shape[1:]) if len(x.shape) > 1 else 1
    flat = x.reshape(n, d)                            # row-major, matches torch.flatten

    total = n * d
    itemsize = x.dtype.itemsize
    layout = _choose_layout(total, itemsize)
    if layout is None:
        # TODO(synk): total not a multiple of 128 -> lane width < 128 emits masked
        # stores; still tile over rows so the block never exceeds the VMEM budget.
        rows, cols = n, d
        block_rows = _largest_divisor_leq(
            n, max(1, _MAX_BLOCK_BYTES // max(1, d * itemsize))
        ) or 1
        view = flat
    else:
        rows, cols, block_rows = layout
        view = flat.reshape(rows, cols)

    out = pl.pallas_call(
        _identity_copy_kernel,
        out_shape=jax.ShapeDtypeStruct((rows, cols), view.dtype),
        grid_spec=pltpu.PrefetchScalarGridSpec(
            num_scalar_prefetch=0,
            grid=(rows // block_rows,),
            in_specs=[pl.BlockSpec((block_rows, cols), lambda i: (i, 0))],
            out_specs=pl.BlockSpec((block_rows, cols), lambda i: (i, 0)),
        ),
        compiler_params=pltpu.CompilerParams(
            dimension_semantics=("parallel",),
            vmem_limit_bytes=_VMEM_LIMIT_BYTES,
        ),
    )(view)
    return out.reshape(n, d)


if __name__ == "__main__":
    key = jax.random.PRNGKey(0)
    # Small NCHW input consistent with the module's usage.
    x = jax.random.normal(key, (2, 4, 16, 16), dtype=jnp.float32)

    # Reference: torch.flatten(x, 1) == row-major reshape to (N, C*H*W).
    ref = identity_flatten_free(x)

    out = jax.block_until_ready(identity_flatten(x))

    assert out.shape == (2, 4 * 16 * 16), out.shape
    assert out.dtype == x.dtype
    assert bool(jnp.all(out == ref)), "mismatch vs reference flatten"

    print("KERNEL_OK")
</pallas_src>

<mosaic_0001>
module attributes {stable_mosaic.version = 11 : i64} {
  func.func @_identity_copy_kernel(%arg0: i32, %arg1: memref<1x2048xf32, #tpu.memory_space<vmem>>, %arg2: memref<1x2048xf32, #tpu.memory_space<vmem>>) attributes {dimension_semantics = [#tpu.dimension_semantics<parallel>], iteration_bounds = array<i64: 1>, scalar_prefetch = 0 : i64, scratch_operands = 0 : i64, tpu.core_type = #tpu.core_type<tc>, window_params = [{transform_indices = @transform_0, window_bounds = array<i64: 1, 2048>}, {transform_indices = @transform_1, window_bounds = array<i64: 1, 2048>}]} {
    %c0 = arith.constant 0 : index
    %c0_0 = arith.constant 0 : index
    %0 = vector.load %arg1[%c0, %c0_0] : memref<1x2048xf32, #tpu.memory_space<vmem>>, vector<1x2048xf32>
    %c0_1 = arith.constant 0 : index
    %c0_2 = arith.constant 0 : index
    %1 = vector.load %arg2[%c0_1, %c0_2] : memref<1x2048xf32, #tpu.memory_space<vmem>>, vector<1x2048xf32>
    tpu.vector_store %arg2[%c0_1, %c0_2], %0 {strides = array<i32>} : memref<1x2048xf32, #tpu.memory_space<vmem>>, vector<1x2048xf32>,
    return
  }
  func.func @transform_0(%arg0: i32) -> (i32, i32) {
    %c0_i32 = arith.constant 0 : i32
    %c0_i32_0 = arith.constant 0 : i32
    return %arg0, %c0_i32 : i32, i32
  }
  func.func @transform_1(%arg0: i32) -> (i32, i32) {
    %c0_i32 = arith.constant 0 : i32
    %c0_i32_0 = arith.constant 0 : i32
    return %arg0, %c0_i32 : i32, i32
  }
}

</mosaic_0001>

<llo_original>
// kernel: identity_flatten.1
$region0: #{identity_flatten.1}
  #allocation0 [shape = 'u32[]', space=smem, size = 0x4, offset = 0x4, fixed_abs, tag = 'smem constant byte address 0x4 - core index']
  #allocation1 [shape = 'u32[72,128]{1,0:T(1,128)}', space=vmem, size = 0x9000, scoped, tag = 'internal scratch']
  %s0 = inlined_call_operand.vmem [shape: f32[1,2048], index: 0, kind: input, shape index: {}]
  %s1 = inlined_call_operand.vmem [shape: f32[1,2048], index: 1, kind: output, shape index: {}]
  %s2 = sld [smem:[#allocation0]]
  $region14: #{identity_flatten.1} parent=0
    _
  %s4 = ssub.s32 1, %s2
  %s5 = scalar_select 0, %s4, %s2
  // Predicated region
  $region2: #{identity_flatten.1} parent=0 // pred_check
    _
  $region3: #{identity_flatten.1} parent=0 // pred_check_branch
    %7 = sbr.rel (0) target = $region5
  $region4: #{identity_flatten.1} parent=0 // pred_region
    _
  $region5: #{identity_flatten.1} parent=0 // pred_fallthru
    _
  %v8 = vld [vmem:[%s0] sm:$0xff]
  %v9 = vld [vmem:[%s0 + $0x8] sm:$0xff]
  %10 = vst [vmem:[%s1] sm:$0xff] %v8
  %11 = vst [vmem:[%s1 + $0x8] sm:$0xff] %v9
  // Predicated region
  $region6: #{identity_flatten.1} parent=0 // pred_check
    _
  $region7: #{identity_flatten.1} parent=0 // pred_check_branch
    %13 = sbr.rel (0) target = $region9
  $region8: #{identity_flatten.1} parent=0 // pred_region
    _
  $region9: #{identity_flatten.1} parent=0 // pred_fallthru
    _
  // Predicated region
  $region10: #{identity_flatten.1} parent=0 // pred_check
    _
  $region11: #{identity_flatten.1} parent=0 // pred_check_branch
    %15 = sbr.rel (0) target = $region13
  $region12: #{identity_flatten.1} parent=0 // pred_region
    _
  $region13: #{identity_flatten.1} parent=0 // pred_fallthru
    _

</llo_original>
